<compile_context>
chip_gen: v7x
topology: tpu7x:2x2x1
jax: 0.10.0
libtpu: 0.0.40
codegen_flags: <defaults>
</compile_context>

<pallas_src>
import functools

import jax
import jax.numpy as jnp
from jax import lax
from jax.experimental import pallas as pl
from jax.experimental.pallas import tpu as pltpu


def _mt_kernel(x_ref, w1_ref, b1_ref, w2_ref, b2_ref, loss_ref, *, ncls, total_b):
    """One batch tile: fused teacher+student forward + softmax-MSE partial sum."""
    # DMA stays f32; cast to bf16 on the VPU right before the MXU (no extra HBM pass).
    x = x_ref[...].astype(jnp.bfloat16)                                 # (bB, D)

    # Layer 1: [teacher | student] fused along the output axis, f32 accumulate.
    z1 = jnp.dot(x, w1_ref[...], preferred_element_type=jnp.float32) + b1_ref[...]
    h = jnp.maximum(z1, 0.0).astype(jnp.bfloat16)                       # (bB, 2H)

    # Layer 2: block-diagonal slab -> [teacher logits | student logits].
    z2 = jnp.dot(h, w2_ref[...],
                 preferred_element_type=jnp.float32) + b2_ref[...]      # (bB, 2C) f32

    bB = z2.shape[0]
    col = lax.broadcasted_iota(jnp.int32, z2.shape, 1)
    is_teacher = col < ncls                                             # lane mask over fused slab

    # Per-half softmax using a SINGLE exp over the fused slab (halves EUP vreg
    # traffic vs. exp-ing each 10-lane half separately).
    neg = jnp.float32(-1e30)
    m_t = jnp.max(jnp.where(is_teacher, z2, neg), axis=1, keepdims=True)
    m_s = jnp.max(jnp.where(is_teacher, neg, z2), axis=1, keepdims=True)
    e = jnp.exp(z2 - jnp.where(is_teacher, m_t, m_s))                   # one exp, (bB, 2C)
    sum_t = jnp.sum(jnp.where(is_teacher, e, 0.0), axis=1, keepdims=True)
    sum_s = jnp.sum(jnp.where(is_teacher, 0.0, e), axis=1, keepdims=True)
    # Exact reciprocal: approx=True would noticeably bias the squared student-teacher gap.
    p = e * pl.reciprocal(jnp.where(is_teacher, sum_t, sum_s), approx=False)

    # Teacher `.detach()` only affects gradients; the forward value is identical.
    # TODO(synk): if this kernel is ever differentiated for training, wrap it in a
    # custom_vjp that stops gradients into the teacher columns of the slabs.
    diff = p[:, ncls:] - p[:, :ncls]                                    # (bB, C) student - teacher

    # Row mask handles a ragged last batch tile (B need not divide block_b).
    row = lax.broadcasted_iota(jnp.int32, (bB, 1), 0) + pl.program_id(0) * bB
    sq = jnp.sum(diff * diff, axis=1, keepdims=True)                    # sum_c (s-t)^2 per row
    sq = jnp.where(row < total_b, sq, 0.0)

    # Mean over classes folded into one scalar multiply; partial sum over this tile.
    loss_ref[0, 0] = jnp.sum(sq) * (1.0 / ncls)


def _pick_block_b(batch):
    # <=1024 rows: single tile (covers demo sizes).  Larger batches: 1K-2K-row
    # tiles so the ~0.35us per-grid-step overhead is amortized and num_tiles >= 2
    # (both v7x TensorCores get work via the "parallel" grid axis).
    if batch <= 1024:
        return batch
    if batch < 4096:
        return 1024
    return 2048


def mt_forward(x_nchw, teacher_params, student_params):
    """Flatten NCHW input, pack teacher+student params into slabs, launch kernel."""
    B = x_nchw.shape[0]
    x_flat = x_nchw.reshape(B, -1)                  # stays f32; the kernel casts to bf16 on-chip
    D = x_flat.shape[1]

    w1t, b1t, w2t, b2t = teacher_params
    w1s, b1s, w2s, b2s = student_params
    HID, NCLS = w2t.shape

    # --- fuse teacher+student parameters into slabs (cheap wrapper-side ops) ---
    # TODO(synk): in a real training loop, fold this assembly into the EMA
    # parameter-update step so it is not re-materialized every forward call.
    w1_slab = jnp.concatenate([w1t, w1s], axis=1).astype(jnp.bfloat16)    # (D, 2H)
    b1_slab = jnp.concatenate([b1t, b1s], axis=1).astype(jnp.float32)     # (1, 2H)
    w2_slab = jnp.zeros((2 * HID, 2 * NCLS), jnp.float32)
    w2_slab = w2_slab.at[:HID, :NCLS].set(w2t).at[HID:, NCLS:].set(w2s)   # block-diag
    w2_slab = w2_slab.astype(jnp.bfloat16)                                # (2H, 2C)
    b2_slab = jnp.concatenate([b2t, b2s], axis=1).astype(jnp.float32)     # (1, 2C)

    block_b = _pick_block_b(B)
    num_tiles = pl.cdiv(B, block_b)

    kernel = functools.partial(_mt_kernel, ncls=NCLS, total_b=B)

    partials = pl.pallas_call(
        kernel,
        out_shape=jax.ShapeDtypeStruct((num_tiles, 1), jnp.float32),
        grid=(num_tiles,),
        in_specs=[
            pl.BlockSpec((block_b, D), lambda i: (i, 0)),            # x tile (pipelined)
            pl.BlockSpec((D, 2 * HID), lambda i: (0, 0)),            # w1 slab (resident)
            pl.BlockSpec((1, 2 * HID), lambda i: (0, 0)),            # b1 slab
            pl.BlockSpec((2 * HID, 2 * NCLS), lambda i: (0, 0)),     # w2 slab (block-diag)
            pl.BlockSpec((1, 2 * NCLS), lambda i: (0, 0)),           # b2 slab
        ],
        out_specs=pl.BlockSpec((1, 1), lambda i: (i, 0),
                               memory_space=pltpu.MemorySpace.SMEM),
        compiler_params=pltpu.CompilerParams(
            dimension_semantics=("parallel",)),                      # shard tiles across TCs
    )(x_flat, w1_slab, b1_slab, w2_slab, b2_slab)

    # Final mean over the batch (per-tile partial sums reduced here).
    return jnp.sum(partials) / B


def _reference(x_nchw, teacher_params, student_params):
    """Pure-JAX reference of the same (bf16-operand, f32-accumulate) forward."""
    B = x_nchw.shape[0]
    x = x_nchw.reshape(B, -1).astype(jnp.bfloat16)

    def mlp(p):
        w1, b1, w2, b2 = p
        h = jnp.maximum(
            jnp.dot(x, w1.astype(jnp.bfloat16),
                    preferred_element_type=jnp.float32) + b1, 0.0)
        return jnp.dot(h.astype(jnp.bfloat16), w2.astype(jnp.bfloat16),
                       preferred_element_type=jnp.float32) + b2

    t = jax.nn.softmax(mlp(teacher_params), axis=1)
    s = jax.nn.softmax(mlp(student_params), axis=1)
    return ((s - t) ** 2).mean(axis=1).mean()


if __name__ == "__main__":
    key = jax.random.PRNGKey(0)
    B, C_in, H_img, W_img = 8, 1, 16, 16          # MNIST-like small input
    D = C_in * H_img * W_img                      # 256
    HID, NCLS = 32, 10

    keys = jax.random.split(key, 9)
    x = jax.random.normal(keys[0], (B, C_in, H_img, W_img), dtype=jnp.float32)

    # Deterministic synthetic parameters (teacher = EMA copy, slightly different).
    w1s = 0.05 * jax.random.normal(keys[1], (D, HID), dtype=jnp.float32)
    b1s = 0.05 * jax.random.normal(keys[2], (1, HID), dtype=jnp.float32)
    w2s = 0.05 * jax.random.normal(keys[3], (HID, NCLS), dtype=jnp.float32)
    b2s = 0.05 * jax.random.normal(keys[4], (1, NCLS), dtype=jnp.float32)

    w1t = w1s + 0.01 * jax.random.normal(keys[5], (D, HID), dtype=jnp.float32)
    b1t = b1s + 0.01 * jax.random.normal(keys[6], (1, HID), dtype=jnp.float32)
    w2t = w2s + 0.01 * jax.random.normal(keys[7], (HID, NCLS), dtype=jnp.float32)
    b2t = b2s + 0.01 * jax.random.normal(keys[8], (1, NCLS), dtype=jnp.float32)

    teacher = (w1t, b1t, w2t, b2t)
    student = (w1s, b1s, w2s, b2s)

    # TODO(synk): moving_average (EMA teacher update) and global_step are
    # optimizer/state-side ops, not part of this forward pass; if fused later,
    # alias the teacher slabs in->out via input_output_aliases to avoid an extra
    # HBM round-trip of the teacher weights per step.

    loss = mt_forward(x, teacher, student)
    jax.block_until_ready(loss)

    ref = _reference(x, teacher, student)
    # bf16 matmul operands => loosened tolerance vs exact f32 reference math.
    assert jnp.allclose(loss, ref, atol=1e-7, rtol=1e-1), (loss, ref)

    print("KERNEL_OK")
</pallas_src>

<mosaic_0001>
module attributes {stable_mosaic.version = 11 : i64} {
  func.func @_mt_kernel(%arg0: i32, %arg1: memref<8x256xf32, #tpu.memory_space<vmem>>, %arg2: memref<256x64xbf16, #tpu.memory_space<vmem>>, %arg3: memref<1x64xf32, #tpu.memory_space<vmem>>, %arg4: memref<64x20xbf16, #tpu.memory_space<vmem>>, %arg5: memref<1x20xf32, #tpu.memory_space<vmem>>, %arg6: memref<1x1xf32, #tpu.memory_space<smem>>) attributes {dimension_semantics = [#tpu.dimension_semantics<parallel>], iteration_bounds = array<i64: 1>, scalar_prefetch = 0 : i64, scratch_operands = 0 : i64, tpu.core_type = #tpu.core_type<tc>, window_params = [{transform_indices = @transform_0, window_bounds = array<i64: 8, 256>}, {pipeline_mode = #tpu.pipeline_mode<synchronous>, transform_indices = @transform_1, window_bounds = array<i64: 256, 64>}, {pipeline_mode = #tpu.pipeline_mode<synchronous>, transform_indices = @transform_2, window_bounds = array<i64: 1, 64>}, {pipeline_mode = #tpu.pipeline_mode<synchronous>, transform_indices = @transform_3, window_bounds = array<i64: 64, 20>}, {pipeline_mode = #tpu.pipeline_mode<synchronous>, transform_indices = @transform_4, window_bounds = array<i64: 1, 20>}, {transform_indices = @transform_5, window_bounds = array<i64: 1, 1>}]} {
    %c0 = arith.constant 0 : index
    %c0_0 = arith.constant 0 : index
    %0 = vector.load %arg1[%c0, %c0_0] : memref<8x256xf32, #tpu.memory_space<vmem>>, vector<8x256xf32>
    %1 = arith.truncf %0 : vector<8x256xf32> to vector<8x256xbf16>
    %c0_1 = arith.constant 0 : index
    %c0_2 = arith.constant 0 : index
    %2 = vector.load %arg2[%c0_1, %c0_2] : memref<256x64xbf16, #tpu.memory_space<vmem>>, vector<256x64xbf16>
    %cst = arith.constant dense<0.000000e+00> : vector<8x64xf32>
    %3 = tpu.matmul %1, %2, %cst {dimension_numbers = #tpu.dot_dimension_numbers<[1], [0], [0], [1], [0, 0, 1, 1], [], []>} : vector<8x256xbf16>, vector<256x64xbf16>, vector<8x64xf32> -> vector<8x64xf32>
    %c0_3 = arith.constant 0 : index
    %c0_4 = arith.constant 0 : index
    %4 = vector.load %arg3[%c0_3, %c0_4] : memref<1x64xf32, #tpu.memory_space<vmem>>, vector<1x64xf32>
    %5 = vector.broadcast %4 : vector<1x64xf32> to vector<8x64xf32>
    %6 = arith.addf %3, %5 : vector<8x64xf32>
    %cst_5 = arith.constant 0.000000e+00 : f32
    %7 = vector.broadcast %cst_5 : f32 to vector<8x64xf32>
    %8 = arith.maximumf %6, %7 : vector<8x64xf32>
    %9 = arith.truncf %8 : vector<8x64xf32> to vector<8x64xbf16>
    %c0_6 = arith.constant 0 : index
    %c0_7 = arith.constant 0 : index
    %10 = vector.load %arg4[%c0_6, %c0_7] : memref<64x20xbf16, #tpu.memory_space<vmem>>, vector<64x20xbf16>
    %cst_8 = arith.constant dense<0.000000e+00> : vector<8x20xf32>
    %11 = tpu.matmul %9, %10, %cst_8 {dimension_numbers = #tpu.dot_dimension_numbers<[1], [0], [0], [1], [0, 0, 1, 1], [], []>} : vector<8x64xbf16>, vector<64x20xbf16>, vector<8x20xf32> -> vector<8x20xf32>
    %c0_9 = arith.constant 0 : index
    %c0_10 = arith.constant 0 : index
    %12 = vector.load %arg5[%c0_9, %c0_10] : memref<1x20xf32, #tpu.memory_space<vmem>>, vector<1x20xf32>
    %13 = vector.broadcast %12 : vector<1x20xf32> to vector<8x20xf32>
    %14 = arith.addf %11, %13 : vector<8x20xf32>
    %15 = tpu.iota {dimensions = array<i32: 1>} : vector<8x20xi32>
    %c10_i32 = arith.constant 10 : i32
    %16 = vector.broadcast %c10_i32 : i32 to vector<8x20xi32>
    %17 = arith.cmpi slt, %15, %16 : vector<8x20xi32>
    %cst_11 = arith.constant -1.000000e+30 : f32
    %18 = vector.broadcast %cst_11 : f32 to vector<8x20xf32>
    %19 = arith.select %17, %14, %18 : vector<8x20xi1>, vector<8x20xf32>
    %cst_12 = arith.constant dense<0xFF800000> : vector<8xf32>
    %20 = vector.multi_reduction <maximumf>, %19, %cst_12 [1] : vector<8x20xf32> to vector<8xf32>
    %21 = vector.shape_cast %20 : vector<8xf32> to vector<8x1xf32>
    %cst_13 = arith.constant -1.000000e+30 : f32
    %22 = vector.broadcast %cst_13 : f32 to vector<8x20xf32>
    %23 = arith.select %17, %22, %14 : vector<8x20xi1>, vector<8x20xf32>
    %cst_14 = arith.constant dense<0xFF800000> : vector<8xf32>
    %24 = vector.multi_reduction <maximumf>, %23, %cst_14 [1] : vector<8x20xf32> to vector<8xf32>
    %25 = vector.shape_cast %24 : vector<8xf32> to vector<8x1xf32>
    %26 = vector.shape_cast %21 : vector<8x1xf32> to vector<8x1xf32>
    %27 = vector.broadcast %26 : vector<8x1xf32> to vector<8x20xf32>
    %28 = vector.shape_cast %25 : vector<8x1xf32> to vector<8x1xf32>
    %29 = vector.broadcast %28 : vector<8x1xf32> to vector<8x20xf32>
    %30 = arith.select %17, %27, %29 : vector<8x20xi1>, vector<8x20xf32>
    %31 = arith.subf %14, %30 : vector<8x20xf32>
    %32 = math.exp %31 : vector<8x20xf32>
    %cst_15 = arith.constant 0.000000e+00 : f32
    %33 = vector.broadcast %cst_15 : f32 to vector<8x20xf32>
    %34 = arith.select %17, %32, %33 : vector<8x20xi1>, vector<8x20xf32>
    %cst_16 = arith.constant dense<0.000000e+00> : vector<8xf32>
    %35 = vector.multi_reduction <add>, %34, %cst_16 [1] : vector<8x20xf32> to vector<8xf32>
    %36 = vector.shape_cast %35 : vector<8xf32> to vector<8x1xf32>
    %cst_17 = arith.constant 0.000000e+00 : f32
    %37 = vector.broadcast %cst_17 : f32 to vector<8x20xf32>
    %38 = arith.select %17, %37, %32 : vector<8x20xi1>, vector<8x20xf32>
    %cst_18 = arith.constant dense<0.000000e+00> : vector<8xf32>
    %39 = vector.multi_reduction <add>, %38, %cst_18 [1] : vector<8x20xf32> to vector<8xf32>
    %40 = vector.shape_cast %39 : vector<8xf32> to vector<8x1xf32>
    %41 = vector.shape_cast %36 : vector<8x1xf32> to vector<8x1xf32>
    %42 = vector.broadcast %41 : vector<8x1xf32> to vector<8x20xf32>
    %43 = vector.shape_cast %40 : vector<8x1xf32> to vector<8x1xf32>
    %44 = vector.broadcast %43 : vector<8x1xf32> to vector<8x20xf32>
    %45 = arith.select %17, %42, %44 : vector<8x20xi1>, vector<8x20xf32>
    %46 = tpu.reciprocal %45 : vector<8x20xf32> -> vector<8x20xf32>
    %47 = arith.mulf %32, %46 : vector<8x20xf32>
    %48 = vector.extract_strided_slice %47 {offsets = [0, 10], sizes = [8, 10], strides = [1, 1]} : vector<8x20xf32> to vector<8x10xf32>
    %49 = vector.extract_strided_slice %47 {offsets = [0, 0], sizes = [8, 10], strides = [1, 1]} : vector<8x20xf32> to vector<8x10xf32>
    %50 = arith.subf %48, %49 : vector<8x10xf32>
    %51 = tpu.iota {dimensions = array<i32: 0>} : vector<8x1xi32>
    %c8_i32 = arith.constant 8 : i32
    %52 = arith.muli %arg0, %c8_i32 : i32
    %53 = vector.broadcast %52 : i32 to vector<8x1xi32>
    %54 = arith.addi %51, %53 : vector<8x1xi32>
    %55 = arith.mulf %50, %50 : vector<8x10xf32>
    %cst_19 = arith.constant dense<0.000000e+00> : vector<8xf32>
    %56 = vector.multi_reduction <add>, %55, %cst_19 [1] : vector<8x10xf32> to vector<8xf32>
    %57 = vector.shape_cast %56 : vector<8xf32> to vector<8x1xf32>
    %c8_i32_20 = arith.constant 8 : i32
    %58 = vector.broadcast %c8_i32_20 : i32 to vector<8x1xi32>
    %59 = arith.cmpi slt, %54, %58 : vector<8x1xi32>
    %cst_21 = arith.constant 0.000000e+00 : f32
    %60 = vector.broadcast %cst_21 : f32 to vector<8x1xf32>
    %61 = arith.select %59, %57, %60 : vector<8x1xi1>, vector<8x1xf32>
    %62 = vector.shape_cast %61 : vector<8x1xf32> to vector<1x8x1xf32>
    %cst_22 = arith.constant dense<0.000000e+00> : vector<1xf32>
    %63 = vector.multi_reduction <add>, %62, %cst_22 [1, 2] : vector<1x8x1xf32> to vector<1xf32>
    %64 = vector.shape_cast %63 : vector<1xf32> to vector<1x1x1xf32>
    %65 = vector.extract %64[0, 0, 0] : f32 from vector<1x1x1xf32>
    %cst_23 = arith.constant 1.000000e-01 : f32
    %66 = arith.mulf %65, %cst_23 : f32
    %c0_24 = arith.constant 0 : index
    %c0_25 = arith.constant 0 : index
    %67 = memref.load %arg6[%c0_24, %c0_25] : memref<1x1xf32, #tpu.memory_space<smem>>
    memref.store %66, %arg6[%c0_24, %c0_25] : memref<1x1xf32, #tpu.memory_space<smem>>
    return
  }
  func.func @transform_0(%arg0: i32) -> (i32, i32) {
    %c0_i32 = arith.constant 0 : i32
    %c0_i32_0 = arith.constant 0 : i32
    return %arg0, %c0_i32 : i32, i32
  }
  func.func @transform_1(%arg0: i32) -> (i32, i32) {
    %c0_i32 = arith.constant 0 : i32
    %c0_i32_0 = arith.constant 0 : i32
    %c0_i32_1 = arith.constant 0 : i32
    return %c0_i32, %c0_i32_0 : i32, i32
  }
  func.func @transform_2(%arg0: i32) -> (i32, i32) {
    %c0_i32 = arith.constant 0 : i32
    %c0_i32_0 = arith.constant 0 : i32
    %c0_i32_1 = arith.constant 0 : i32
    return %c0_i32, %c0_i32_0 : i32, i32
  }
  func.func @transform_3(%arg0: i32) -> (i32, i32) {
    %c0_i32 = arith.constant 0 : i32
    %c0_i32_0 = arith.constant 0 : i32
    %c0_i32_1 = arith.constant 0 : i32
    return %c0_i32, %c0_i32_0 : i32, i32
  }
  func.func @transform_4(%arg0: i32) -> (i32, i32) {
    %c0_i32 = arith.constant 0 : i32
    %c0_i32_0 = arith.constant 0 : i32
    %c0_i32_1 = arith.constant 0 : i32
    return %c0_i32, %c0_i32_0 : i32, i32
  }
  func.func @transform_5(%arg0: i32) -> (i32, i32) {
    %c0_i32 = arith.constant 0 : i32
    %c0_i32_0 = arith.constant 0 : i32
    return %arg0, %c0_i32 : i32, i32
  }
}

</mosaic_0001>

<llo_original>
// kernel: tpu_custom_call.1
$region0: #{tpu_custom_call.1}
  #allocation0 [shape = 'u32[]', space=smem, size = 0x4, offset = 0x4, fixed_abs, tag = 'smem constant byte address 0x4 - core index']
  #allocation1 [shape = 'u32[144,128]{1,0:T(1,128)}', space=vmem, size = 0x12000, scoped, tag = 'internal scratch']
  %s0 = inlined_call_operand.vmem [shape: f32[8,256], index: 0, kind: input, shape index: {}]
  %s1 = inlined_call_operand.vmem [shape: bf16[256,64], index: 1, kind: input, shape index: {}]
  %s2 = inlined_call_operand.vmem [shape: f32[1,64], index: 2, kind: input, shape index: {}]
  %s3 = inlined_call_operand.vmem [shape: bf16[64,20], index: 3, kind: input, shape index: {}]
  %s4 = inlined_call_operand.vmem [shape: f32[1,20], index: 4, kind: input, shape index: {}]
  %s5 = inlined_call_operand.hbm [shape: f32[1,1], index: 5, kind: output, shape index: {}]
  %s6 = sld [smem:[#allocation0]]
  $region30: #{tpu_custom_call.1} parent=0
    _
  %s8 = ssub.s32 1, %s6
  %s9 = scalar_select 0, %s8, %s6
  $region1: #{tpu_custom_call.1} parent=0
    #allocation2 [shape = 'u8[512]{0}', space=smem, size = 0x200, scoped, tag = 'output window, operand 0, single buffered']
    #allocation3 [shape = 's32[1]{0}', space=sflag, size = 0x4, scoped, tag = 'scoped memory for tpu_custom_call.1']
    %10 = vsyncpa [#allocation3], 0
    // Predicated region
    $region2: #{tpu_custom_call.1} parent=1 // pred_check
      _
    $region3: #{tpu_custom_call.1} parent=1 // pred_check_branch
      %12 = sbr.rel (0) target = $region5
    $region4: #{tpu_custom_call.1} parent=1 // pred_region
      _
    $region5: #{tpu_custom_call.1} parent=1 // pred_fallthru
      _
    // Predicated region
    $region6: #{tpu_custom_call.1} parent=1 // pred_check
      _
    $region7: #{tpu_custom_call.1} parent=1 // pred_check_branch
      %14 = sbr.rel (0) target = $region9
    $region8: #{tpu_custom_call.1} parent=1 // pred_region
      _
    $region9: #{tpu_custom_call.1} parent=1 // pred_fallthru
      _
    // Predicated region
    $region10: #{tpu_custom_call.1} parent=1 // pred_check
      _
    $region11: #{tpu_custom_call.1} parent=1 // pred_check_branch
      %16 = sbr.rel (0) target = $region13
    $region12: #{tpu_custom_call.1} parent=1 // pred_region
      _
    $region13: #{tpu_custom_call.1} parent=1 // pred_fallthru
      _
    // Predicated region
    $region14: #{tpu_custom_call.1} parent=1 // pred_check
      _
    $region15: #{tpu_custom_call.1} parent=1 // pred_check_branch
      %18 = sbr.rel (0) target = $region17
    $region16: #{tpu_custom_call.1} parent=1 // pred_region
      _
    $region17: #{tpu_custom_call.1} parent=1 // pred_fallthru
      _
    // Predicated region
    $region18: #{tpu_custom_call.1} parent=1 // pred_check
      _
    $region19: #{tpu_custom_call.1} parent=1 // pred_check_branch
      %20 = sbr.rel (0) target = $region21
    $region20: #{tpu_custom_call.1} parent=1 // pred_region
      _
    $region21: #{tpu_custom_call.1} parent=1 // pred_fallthru
      _
    %v22 = vld [vmem:[%s0] sm:$0xff]
    %v23 = vld [vmem:[%s0 + $0x8] sm:$0xff]
    %v24 = vpack.c.bf16 %v22, %v22
    %v25 = vpack.c.bf16 %v23, %v23
    %v26 = vld [vmem:[%s1] sm:$0xf]
    %v27 = vld [vmem:[%s1 + $0x4] sm:$0xf]
    %v28 = vld [vmem:[%s1 + $0x8] sm:$0xf]
    %v29 = vld [vmem:[%s1 + $0xc] sm:$0xf]
    %v30 = vld [vmem:[%s1 + $0x10] sm:$0xf]
    %v31 = vld [vmem:[%s1 + $0x14] sm:$0xf]
    %v32 = vld [vmem:[%s1 + $0x18] sm:$0xf]
    %v33 = vld [vmem:[%s1 + $0x1c] sm:$0xf]
    %v34 = vld [vmem:[%s1 + $0x20] sm:$0xf]
    %v35 = vld [vmem:[%s1 + $0x24] sm:$0xf]
    %v36 = vld [vmem:[%s1 + $0x28] sm:$0xf]
    %v37 = vld [vmem:[%s1 + $0x2c] sm:$0xf]
    %v38 = vld [vmem:[%s1 + $0x30] sm:$0xf]
    %v39 = vld [vmem:[%s1 + $0x34] sm:$0xf]
    %v40 = vld [vmem:[%s1 + $0x38] sm:$0xf]
    %v41 = vld [vmem:[%s1 + $0x3c] sm:$0xf]
    %v42 = vld [vmem:[%s1 + $0x40] sm:$0xf]
    %v43 = vld [vmem:[%s1 + $0x44] sm:$0xf]
    %v44 = vld [vmem:[%s1 + $0x48] sm:$0xf]
    %v45 = vld [vmem:[%s1 + $0x4c] sm:$0xf]
    %v46 = vld [vmem:[%s1 + $0x50] sm:$0xf]
    %v47 = vld [vmem:[%s1 + $0x54] sm:$0xf]
    %v48 = vld [vmem:[%s1 + $0x58] sm:$0xf]
    %v49 = vld [vmem:[%s1 + $0x5c] sm:$0xf]
    %v50 = vld [vmem:[%s1 + $0x60] sm:$0xf]
    %v51 = vld [vmem:[%s1 + $0x64] sm:$0xf]
    %v52 = vld [vmem:[%s1 + $0x68] sm:$0xf]
    %v53 = vld [vmem:[%s1 + $0x6c] sm:$0xf]
    %v54 = vld [vmem:[%s1 + $0x70] sm:$0xf]
    %v55 = vld [vmem:[%s1 + $0x74] sm:$0xf]
    %v56 = vld [vmem:[%s1 + $0x78] sm:$0xf]
    %v57 = vld [vmem:[%s1 + $0x7c] sm:$0xf]
    %v58 = vld [vmem:[%s2] sm:$0x1]
    %v60 = vlaneseq
    %v61 = vshrl.u32 %v60, 7
    %v62 = vsub.s32 0, %v61
    %v63 = vrot.slane %v58, %v62
    %v97 = vunpack.c.l.b16 %v26
    %v98 = vunpack.c.l.b16 %v27
    %v99 = vunpack.c.l.b16 %v28
    %v100 = vunpack.c.l.b16 %v29
    %v101 = vunpack.c.l.b16 %v30
    %v102 = vunpack.c.l.b16 %v31
    %v103 = vunpack.c.l.b16 %v32
    %v104 = vunpack.c.l.b16 %v33
    %v105 = vunpack.c.l.b16 %v34
    %v106 = vunpack.c.l.b16 %v35
    %v107 = vunpack.c.l.b16 %v36
    %v108 = vunpack.c.l.b16 %v37
    %v109 = vunpack.c.l.b16 %v38
    %v110 = vunpack.c.l.b16 %v39
    %v111 = vunpack.c.l.b16 %v40
    %v112 = vunpack.c.l.b16 %v41
    %v113 = vunpack.c.l.b16 %v42
    %v114 = vunpack.c.l.b16 %v43
    %v115 = vunpack.c.l.b16 %v44
    %v116 = vunpack.c.l.b16 %v45
    %v117 = vunpack.c.l.b16 %v46
    %v118 = vunpack.c.l.b16 %v47
    %v119 = vunpack.c.l.b16 %v48
    %v120 = vunpack.c.l.b16 %v49
    %v121 = vunpack.c.l.b16 %v50
    %v122 = vunpack.c.l.b16 %v51
    %v123 = vunpack.c.l.b16 %v52
    %v124 = vunpack.c.l.b16 %v53
    %v125 = vunpack.c.l.b16 %v54
    %v126 = vunpack.c.l.b16 %v55
    %v127 = vunpack.c.l.b16 %v56
    %v128 = vunpack.c.l.b16 %v57
    %v129 = vpack.c.b16 %v98, %v97
    %v130 = vpack.c.b16 %v100, %v99
    %v131 = vpack.c.b16 %v102, %v101
    %v132 = vpack.c.b16 %v104, %v103
    %v133 = vpack.c.b16 %v106, %v105
    %v134 = vpack.c.b16 %v108, %v107
    %v135 = vpack.c.b16 %v110, %v109
    %v136 = vpack.c.b16 %v112, %v111
    %v137 = vpack.c.b16 %v114, %v113
    %v138 = vpack.c.b16 %v116, %v115
    %v139 = vpack.c.b16 %v118, %v117
    %v140 = vpack.c.b16 %v120, %v119
    %v141 = vpack.c.b16 %v122, %v121
    %v142 = vpack.c.b16 %v124, %v123
    %v143 = vpack.c.b16 %v126, %v125
    %v144 = vpack.c.b16 %v128, %v127
    %161 = vmatprep.subr.bf16.mxu0 0
    %162 = vmatpush1.bf16.msra.mxu0 %v129
    %163 = vmatprep.subr.bf16.mxu0 0
    %164 = vmatpush1.bf16.msra.mxu0 %v130
    %165 = vmatprep.subr.bf16.mxu0 0
    %166 = vmatpush1.bf16.msra.mxu0 %v131
    %167 = vmatprep.subr.bf16.mxu0 0
    %168 = vmatpush1.bf16.msra.mxu0 %v132
    %169 = vmatprep.subr.bf16.mxu0 0
    %170 = vmatpush1.bf16.msra.mxu0 %v133
    %171 = vmatprep.subr.bf16.mxu0 0
    %172 = vmatpush1.bf16.msra.mxu0 %v134
    %173 = vmatprep.subr.bf16.mxu0 0
    %174 = vmatpush1.bf16.msra.mxu0 %v135
    %175 = vmatprep.subr.bf16.mxu0 0
    %176 = vmatpush1.bf16.msra.mxu0 %v136
    %177 = vmatprep.subr.bf16.mxu0 0
    %178 = vmatpush1.bf16.msra.mxu0 %v137
    %179 = vmatprep.subr.bf16.mxu0 0
    %180 = vmatpush1.bf16.msra.mxu0 %v138
    %181 = vmatprep.subr.bf16.mxu0 0
    %182 = vmatpush1.bf16.msra.mxu0 %v139
    %183 = vmatprep.subr.bf16.mxu0 0
    %184 = vmatpush1.bf16.msra.mxu0 %v140
    %185 = vmatprep.subr.bf16.mxu0 0
    %186 = vmatpush1.bf16.msra.mxu0 %v141
    %187 = vmatprep.subr.bf16.mxu0 0
    %188 = vmatpush1.bf16.msra.mxu0 %v142
    %189 = vmatprep.subr.bf16.mxu0 0
    %190 = vmatpush1.bf16.msra.mxu0 %v143
    %191 = vmatprep.subr.bf16.mxu0 0
    %192 = vmatpush1.bf16.msra.mxu0 %v144
    %193 = vmatprep.mubr.bf16.mxu0 %v25
    %194 = vmatmul.mubr.bf16.gmra.mrb[0].mxu0 %v24
    %v195 = vpop.f32.mrb[0].mxu0
    %v196 = vadd.f32 %v63, %v195
    %v197 = vpop.f32.mrb[0].mxu0
    %v198 = vpop.f32.mrb[0].mxu0
    %v199 = vpop.f32.mrb[0].mxu0
    %200 = vdwg.mxu0
    %v201 = vmax.f32 %v196, 0.0
    %v202 = vpack.c.bf16 %v201, %v201
    %v203 = vld [vmem:[%s3] sm:$0xf]
    %v204 = vld [vmem:[%s3 + $0x4] sm:$0xf]
    %v205 = vld [vmem:[%s3 + $0x8] sm:$0xf]
    %v206 = vld [vmem:[%s3 + $0xc] sm:$0xf]
    %v207 = vld [vmem:[%s3 + $0x10] sm:$0xf]
    %v208 = vld [vmem:[%s3 + $0x14] sm:$0xf]
    %v209 = vld [vmem:[%s3 + $0x18] sm:$0xf]
    %v210 = vld [vmem:[%s3 + $0x1c] sm:$0xf]
    %v211 = vld [vmem:[%s4] sm:$0x1]
    %v213 = vlaneseq
    %v214 = vshrl.u32 %v213, 7
    %v215 = vsub.s32 0, %v214
    %v216 = vrot.slane %v211, %v215
    %v226 = vunpack.c.l.b16 %v203
    %v227 = vunpack.c.l.b16 %v204
    %v228 = vunpack.c.l.b16 %v205
    %v229 = vunpack.c.l.b16 %v206
    %v230 = vunpack.c.l.b16 %v207
    %v231 = vunpack.c.l.b16 %v208
    %v232 = vunpack.c.l.b16 %v209
    %v233 = vunpack.c.l.b16 %v210
    %v234 = vpack.c.b16 %v227, %v226
    %v235 = vpack.c.b16 %v229, %v228
    %v236 = vpack.c.b16 %v231, %v230
    %v237 = vpack.c.b16 %v233, %v232
    %vm242 = vcmask 523264
    %v244 = vsel %vm242, %v202, 0
    %246 = vmatprep.subr.bf16.mxu0 0
    %247 = vmatpush1.bf16.msra.mxu0 %v234
    %248 = vmatprep.subr.bf16.mxu0 0
    %249 = vmatpush1.bf16.msra.mxu0 %v235
    %250 = vmatprep.subr.bf16.mxu0 0
    %251 = vmatpush1.bf16.msra.mxu0 %v236
    %252 = vmatprep.subr.bf16.mxu0 0
    %253 = vmatpush1.bf16.msra.mxu0 %v237
    %254 = vmatprep.subr.bf16.mxu0 0
    %255 = vmatpush1.bf16.msra.mxu0 0
    %256 = vmatprep.subr.bf16.mxu0 0
    %257 = vmatpush1.bf16.msra.mxu0 0
    %258 = vmatprep.subr.bf16.mxu0 0
    %259 = vmatpush1.bf16.msra.mxu0 0
    %260 = vmatprep.subr.bf16.mxu0 0
    %261 = vmatpush1.bf16.msra.mxu0 0
    %262 = vmatprep.subr.bf16.mxu0 0
    %263 = vmatpush1.bf16.msra.mxu0 0
    %264 = vmatprep.subr.bf16.mxu0 0
    %265 = vmatpush1.bf16.msra.mxu0 0
    %266 = vmatprep.subr.bf16.mxu0 0
    %267 = vmatpush1.bf16.msra.mxu0 0
    %268 = vmatprep.subr.bf16.mxu0 0
    %269 = vmatpush1.bf16.msra.mxu0 0
    %270 = vmatprep.subr.bf16.mxu0 0
    %271 = vmatpush1.bf16.msra.mxu0 0
    %272 = vmatprep.subr.bf16.mxu0 0
    %273 = vmatpush1.bf16.msra.mxu0 0
    %274 = vmatprep.subr.bf16.mxu0 0
    %275 = vmatpush1.bf16.msra.mxu0 0
    %276 = vmatprep.subr.bf16.mxu0 0
    %277 = vmatpush1.bf16.msra.mxu0 0
    %278 = vmatprep.mubr.bf16.mxu0 0
    %279 = vmatmul.mubr.bf16.gmra.mrb[0].mxu0 %v244
    %v280 = vpop.f32.mrb[0].mxu0
    %v281 = vadd.f32 %v216, %v280
    %v282 = vpop.f32.mrb[0].mxu0
    %v283 = vpop.f32.mrb[0].mxu0
    %v284 = vpop.f32.mrb[0].mxu0
    %285 = vdwg.mxu0
    %v286 = vlaneseq
    %v287 = vand.u32 %v286, 127
    %vm288 = vcmp.lt.s32.totalorder %v287, 10
    %v289 = vsel %vm288, %v281, -1e+30
    %vm290 = vcmask 162816
    %v291 = vsel %vm290, %v289, -inf
    %292 = vmax.xlane.f32.xlu0 %v291
    %v293 = vpop.xlane.xlu0 %292
    %v294 = vsel %vm288, -1e+30, %v281
    %v295 = vsel %vm290, %v294, -inf
    %296 = vmax.xlane.f32.xlu0 %v295
    %v297 = vpop.xlane.xlu0 %296
    %v298 = vsel %vm288, %v293, %v297
    %v299 = vsub.f32 %v281, %v298
    %v300 = vmul.f32 %v299, 1.442695
    %v301 = vpow.pop %v300
    %v302 = vsel %vm288, %v301, 0.0
    %v303 = vsel %vm290, %v302, 0.0
    %304 = vadd.xlane.f32.xlu0 %v303
    %v305 = vpop.xlane.xlu0 %304
    %v306 = vsel %vm288, 0.0, %v301
    %v307 = vsel %vm290, %v306, 0.0
    %308 = vadd.xlane.f32.xlu0 %v307
    %v309 = vpop.xlane.xlu0 %308
    %v310 = vsel %vm288, %v305, %v309
    %v311 = vrcp.pop %v310
    %v312 = vmul.f32 %v301, %v311
    %314 = vrot.lane.b32.xlu0 %v312, 10
    %v315 = vpop.permute.xlu0 %314
    %v317 = vsub.f32 %v312, %v315
    %v318 = vlaneseq
    %v319 = vshrl.u32 %v318, 7
    %s320 = smul.u32 0, 8
    %v321 = vstv %s320
    %v322 = vadd.s32 %v319, %v321
    %v323 = vmul.f32 %v317, %v317
    %325 = vrot.lane.b32.xlu0 %v323, 118
    %v326 = vpop.permute.xlu0 %325
    %vm328 = vcmask 80896
    %v329 = vsel %vm328, %v326, 0.0
    %330 = vadd.xlane.f32.xlu0 %v329
    %v331 = vpop.xlane.xlu0 %330
    %vm332 = vcmp.lt.s32.totalorder %v322, 8
    %v333 = vsel %vm332, %v331, 0.0
    %vm334 = vcmask 7168
    %v335 = vsel %vm334, %v333, 0.0
    %336 = vadd.xlane.f32.xlu0 %v335
    %v337 = vpop.xlane.xlu0 %336
    %v338 = vrot.slane %v337, 4
    %v339 = vadd.f32 %v337, %v338
    %v340 = vrot.slane %v339, 2
    %v341 = vadd.f32 %v339, %v340
    %v342 = vrot.slane %v341, 1
    %v343 = vadd.f32 %v341, %v342
    %s344 = vtos %v343
    %s345 = smul.f32 %s344, 0.1
    %s346 = scalar_lea.smem [#allocation2], 0
    %347 = sst [smem:[%s346]] %s345
    // Predicated region
    $region22: #{tpu_custom_call.1} parent=1 // pred_check
      _
    $region23: #{tpu_custom_call.1} parent=1 // pred_check_branch
      %349 = sbr.rel (0) target = $region25
    $region24: #{tpu_custom_call.1} parent=1 // pred_region
      %s351 = ssub.s32 16, 16
      %352 = vsyncadd [#allocation3], %s351
      %355 = dma.smem_to_hbm [#allocation2], 16, %s5, [#allocation3]
    $region25: #{tpu_custom_call.1} parent=1 // pred_fallthru
      _
    // Predicated region
    $region26: #{tpu_custom_call.1} parent=1 // pred_check
      _
    $region27: #{tpu_custom_call.1} parent=1 // pred_check_branch
      %357 = sbr.rel (0) target = $region29
    $region28: #{tpu_custom_call.1} parent=1 // pred_region
      %358 = dma.done [#allocation3], 16
    $region29: #{tpu_custom_call.1} parent=1 // pred_fallthru
      _
    %359 = sfence
    %360 = vsyncpa [#allocation3], 1

</llo_original>
